<compile_context>
chip_gen: v7x
topology: tpu7x:2x2x1
jax: 0.10.0
libtpu: 0.0.40
codegen_flags: <defaults>
</compile_context>

<pallas_src>
import math
from functools import partial

import jax
import jax.numpy as jnp
from jax.experimental import pallas as pl
from jax.experimental.pallas import tpu as pltpu


def _silu(x):
    return x * jax.nn.sigmoid(x)


# ----------------------------- Pallas kernels -----------------------------

def mlp2_kernel(s_ref, w1_ref, b1_ref, w2_ref, b2_ref, out_ref):
    """Per-node 2-layer MLP: Linear -> SiLU -> Linear (used for phi and readout)."""
    h = jnp.dot(s_ref[...], w1_ref[...], preferred_element_type=jnp.float32) + b1_ref[...]
    h = _silu(h)
    out_ref[...] = jnp.dot(h, w2_ref[...], preferred_element_type=jnp.float32) + b2_ref[...]


def layer_kernel(F, R, Tb, Sb,
                 s_ref, vt_ref, vs_ref, phi_ref, rbf_ref, fenv_ref, rhat_ref,
                 wr_ref, br_ref,
                 uvw_ref, uvb_ref,
                 m1a_ref, m1b_ref, mb1_ref, m2_ref, mb2_ref,
                 new_s_ref, new_v_ref,
                 ds_acc, dv_acc):
    """Fused message (reduce over source blocks) + update (per-node) layer.

    Grid: (target blocks [parallel], source blocks [arbitrary reduction]).
    s_ref:   [Tb, F]        target block of scalar features
    vt_ref:  [3, Tb, F]     target block of vector features (residual)
    vs_ref:  [3, Sb, F]     source block of vector features (gather)
    phi_ref: [Sb, 2F]       source block of the message MLP output
    rbf_ref: [Tb, Sb, R]    sin-RBF of pair distances (precomputed)
    fenv_ref:[Tb, Sb, 1]    fcut * validity-mask envelope (precomputed)
    rhat_ref:[3, Tb, Sb, 1] unit direction components (precomputed)
    uvw_ref: [F, 2F]        fused U|V projection weights, uvb_ref: [1, 2F]
    """
    j = pl.program_id(1)

    @pl.when(j == 0)
    def _init():
        ds_acc[...] = jnp.zeros_like(ds_acc)
        dv_acc[...] = jnp.zeros_like(dv_acc)

    # ------------------------- message phase -------------------------
    rbf = rbf_ref[...]                                              # [Tb, Sb, R]
    W = jnp.dot(rbf.reshape(Tb * Sb, R), wr_ref[...],
                preferred_element_type=jnp.float32) + br_ref[...]   # [Tb*Sb, 2F]
    W = W.reshape(Tb, Sb, 2 * F) * fenv_ref[...]                    # envelope folds mask+fcut
    split = W * phi_ref[...][None, :, :]                            # gather phi[src] = broadcast
    Wvv = split[:, :, :F]
    Wvs = split[:, :, F:]                                           # (third chunk of original 3F)

    ds_acc[...] += jnp.sum(Wvs, axis=1)                             # scatter-add = sum over src
    for c in range(3):                                              # statically unrolled; keeps
        term = Wvv * vs_ref[c][None, :, :] + Wvs * rhat_ref[c]      # live edge tensor [Tb,Sb,F]
        dv_acc[c] += jnp.sum(term, axis=1)

    # ------------------------- update phase (after full source reduction) ----
    @pl.when(j == pl.num_programs(1) - 1)
    def _finalize():
        s_m = s_ref[...] + ds_acc[...]                              # [Tb, F]
        v_m = vt_ref[...] + dv_acc[...]                             # [3, Tb, F]

        # Fused U|V projection: one [3*Tb, F] x [F, 2F] MXU call.
        v_flat = v_m.reshape(3 * Tb, F)
        UV = (jnp.dot(v_flat, uvw_ref[...], preferred_element_type=jnp.float32)
              + uvb_ref[...]).reshape(3, Tb, 2 * F)
        Uv = UV[:, :, :F]
        Vv = UV[:, :, F:]
        Vv_norm = jnp.sqrt(Vv[0] ** 2 + Vv[1] ** 2 + Vv[2] ** 2)    # norm over spatial dim

        # mlp input is cat([Vv_norm, s]); first Linear pre-split (m1a | m1b).
        h = (jnp.dot(Vv_norm, m1a_ref[...], preferred_element_type=jnp.float32)
             + jnp.dot(s_m, m1b_ref[...], preferred_element_type=jnp.float32)
             + mb1_ref[...])
        h = _silu(h)
        out = jnp.dot(h, m2_ref[...], preferred_element_type=jnp.float32) + mb2_ref[...]
        a_vv = out[:, :F]
        a_sv = out[:, F:2 * F]
        a_ss = out[:, 2 * F:]

        dot = Uv[0] * Vv[0] + Uv[1] * Vv[1] + Uv[2] * Vv[2]
        new_s_ref[...] = s_m + a_sv * dot + a_ss
        new_v_ref[...] = v_m + a_vv[None, :, :] * Uv


# ----------------------------- host-side wrappers -----------------------------

def phi_step(s, mp, F, Tb):
    N = s.shape[0]
    return pl.pallas_call(
        mlp2_kernel,
        out_shape=jax.ShapeDtypeStruct((N, 2 * F), jnp.float32),
        grid_spec=pltpu.PrefetchScalarGridSpec(
            num_scalar_prefetch=0, grid=(N // Tb,),
            in_specs=[pl.BlockSpec((Tb, F), lambda i: (i, 0)),
                      pl.BlockSpec((F, F), lambda i: (0, 0)),
                      pl.BlockSpec((1, F), lambda i: (0, 0)),
                      pl.BlockSpec((F, 2 * F), lambda i: (0, 0)),
                      pl.BlockSpec((1, 2 * F), lambda i: (0, 0))],
            out_specs=pl.BlockSpec((Tb, 2 * F), lambda i: (i, 0))),
        compiler_params=pltpu.CompilerParams(dimension_semantics=("parallel",)),
    )(s, mp['w1'], mp['b1'], mp['w2'], mp['b2'])


def layer_step(s, v, phi, rbf, fenv, rhat, mp, up, F, R, Tb, Sb):
    N = s.shape[0]
    F2 = 2 * F
    grid = (N // Tb, N // Sb)

    in_specs = [
        pl.BlockSpec((Tb, F),        lambda i, j: (i, 0)),        # s      (target block)
        pl.BlockSpec((3, Tb, F),     lambda i, j: (0, i, 0)),     # v      (target block)
        pl.BlockSpec((3, Sb, F),     lambda i, j: (0, j, 0)),     # v      (source block)
        pl.BlockSpec((Sb, F2),       lambda i, j: (j, 0)),        # phi    (source block)
        pl.BlockSpec((Tb, Sb, R),    lambda i, j: (i, j, 0)),     # rbf
        pl.BlockSpec((Tb, Sb, 1),    lambda i, j: (i, j, 0)),     # fcut*mask envelope
        pl.BlockSpec((3, Tb, Sb, 1), lambda i, j: (0, i, j, 0)),  # rhat components
        pl.BlockSpec((R, F2),        lambda i, j: (0, 0)),        # wr
        pl.BlockSpec((1, F2),        lambda i, j: (0, 0)),        # br
        pl.BlockSpec((F, F2),        lambda i, j: (0, 0)),        # uvw (U|V fused)
        pl.BlockSpec((1, F2),        lambda i, j: (0, 0)),        # uvb
        pl.BlockSpec((F, F),         lambda i, j: (0, 0)),        # m1a
        pl.BlockSpec((F, F),         lambda i, j: (0, 0)),        # m1b
        pl.BlockSpec((1, F),         lambda i, j: (0, 0)),        # mb1
        pl.BlockSpec((F, 3 * F),     lambda i, j: (0, 0)),        # m2
        pl.BlockSpec((1, 3 * F),     lambda i, j: (0, 0)),        # mb2
    ]
    out_specs = [
        pl.BlockSpec((Tb, F),    lambda i, j: (i, 0)),
        pl.BlockSpec((3, Tb, F), lambda i, j: (0, i, 0)),
    ]
    return pl.pallas_call(
        partial(layer_kernel, F, R, Tb, Sb),
        out_shape=(jax.ShapeDtypeStruct((N, F), jnp.float32),
                   jax.ShapeDtypeStruct((3, N, F), jnp.float32)),
        grid_spec=pltpu.PrefetchScalarGridSpec(
            num_scalar_prefetch=0, grid=grid,
            in_specs=in_specs, out_specs=out_specs,
            scratch_shapes=[pltpu.VMEM((Tb, F), jnp.float32),
                            pltpu.VMEM((3, Tb, F), jnp.float32)]),
        compiler_params=pltpu.CompilerParams(
            dimension_semantics=("parallel", "arbitrary"),
            vmem_limit_bytes=32 * 1024 * 1024),
    )(s, v, v, phi, rbf, fenv, rhat,
      mp['wr'], mp['br'],
      up['uvw'], up['uvb'],
      up['m1a'], up['m1b'], up['mb1'], up['m2'], up['mb2'])


def readout_step(s, rp, F, O, Tb):
    N = s.shape[0]
    return pl.pallas_call(
        mlp2_kernel,
        out_shape=jax.ShapeDtypeStruct((N, O), jnp.float32),
        grid_spec=pltpu.PrefetchScalarGridSpec(
            num_scalar_prefetch=0, grid=(N // Tb,),
            in_specs=[pl.BlockSpec((Tb, F), lambda i: (i, 0)),
                      pl.BlockSpec((F, F), lambda i: (0, 0)),
                      pl.BlockSpec((1, F), lambda i: (0, 0)),
                      pl.BlockSpec((F, O), lambda i: (0, 0)),
                      pl.BlockSpec((1, O), lambda i: (0, 0))],
            out_specs=pl.BlockSpec((Tb, O), lambda i: (i, 0))),
        compiler_params=pltpu.CompilerParams(dimension_semantics=("parallel",)),
    )(s, rp['w1'], rp['b1'], rp['w2'], rp['b2'])


# ----------------------------- precompute / param prep -----------------------------

def edge_features(pos, graph_idx, R, cutoff):
    """Layer-invariant edge geometry on the dense masked all-pairs set.

    Returns rbf [N,N,R], fenv [N,N,1] (fcut*mask), rhat [3,N,N,1]."""
    N = pos.shape[0]
    diff = pos[None, :, :] - pos[:, None, :]               # diff[i, j] = pos[j] - pos[i]
    dist = jnp.sqrt(jnp.sum(diff ** 2, axis=-1))           # [N, N]
    eye = jnp.eye(N, dtype=bool)
    mask = ((graph_idx[:, None] == graph_idx[None, :]) & (~eye)).astype(jnp.float32)
    d_safe = dist + (1.0 - mask)                           # avoid /0 on masked (self) edges
    inv_d = 1.0 / d_safe
    n = jnp.arange(1, R + 1, dtype=jnp.float32)
    rbf = jnp.sin(d_safe[..., None] * n * (math.pi / cutoff)) * inv_d[..., None]
    fcut = jnp.where(dist < cutoff, 0.5 * (jnp.cos(math.pi * dist / cutoff) + 1.0), 0.0)
    fenv = (fcut * mask)[..., None]                        # [N, N, 1]
    rhat = jnp.transpose(diff * inv_d[..., None], (2, 0, 1))[..., None]   # [3, N, N, 1]
    return rbf, fenv, rhat


def prepare_params(params, F):
    """Host-side weight prep:
       * slice the dead middle F chunk out of the message projections (-> 2F wide)
       * fuse the update-layer U and V projections into one [F, 2F] weight."""
    dev = {'embedding': params['embedding'],
           'readout': params['readout'],
           'message': [], 'update': []}
    for mp in params['message']:
        dev['message'].append(dict(
            w1=mp['w1'], b1=mp['b1'],
            w2=jnp.concatenate([mp['w2'][:, :F], mp['w2'][:, 2 * F:]], axis=1),
            b2=jnp.concatenate([mp['b2'][:, :F], mp['b2'][:, 2 * F:]], axis=1),
            wr=jnp.concatenate([mp['wr'][:, :F], mp['wr'][:, 2 * F:]], axis=1),
            br=jnp.concatenate([mp['br'][:, :F], mp['br'][:, 2 * F:]], axis=1)))
    for up in params['update']:
        dev['update'].append(dict(
            uvw=jnp.concatenate([up['uw'], up['vw']], axis=1),
            uvb=jnp.concatenate([up['ub'], up['vb']], axis=1),
            m1a=up['m1a'], m1b=up['m1b'], mb1=up['mb1'],
            m2=up['m2'], mb2=up['mb2']))
    return dev


def painn_forward(atoms, pos, graph_idx, params, F, R, O, cutoff, Tb=None, Sb=None):
    N = pos.shape[0]
    Tb = Tb if Tb is not None else min(N, 128)
    Sb = Sb if Sb is not None else min(N, 128)
    assert N % Tb == 0 and N % Sb == 0
    assert (Tb % 8 == 0 or Tb == N) and (Sb % 8 == 0 or Sb == N)

    dev = prepare_params(params, F)
    rbf, fenv, rhat = edge_features(pos, graph_idx, R, cutoff)   # hoisted: once per forward
    s = dev['embedding'][atoms]                                  # glue: embedding gather
    v = jnp.zeros((3, N, F), jnp.float32)
    for mp, up in zip(dev['message'], dev['update']):
        phi = phi_step(s, mp, F, Tb)
        s, v = layer_step(s, v, phi, rbf, fenv, rhat, mp, up, F, R, Tb, Sb)
    return readout_step(s, dev['readout'], F, O, Tb)


# ----------------------------- pure-JAX reference -----------------------------

def _ref_forward(atoms, pos, graph_idx, params, F, R, O, cutoff):
    N = pos.shape[0]
    ar = jnp.arange(N)
    diff = pos[None, :, :] - pos[:, None, :]
    dist2d = jnp.sqrt(jnp.sum(diff ** 2, axis=-1))
    mask2d = ((graph_idx[:, None] == graph_idx[None, :])
              & (ar[:, None] != ar[None, :])).astype(jnp.float32)
    E = N * N
    r_ij = diff.reshape(E, 3)
    dist = dist2d.reshape(E, 1)
    mask = mask2d.reshape(E, 1)
    src = jnp.tile(ar, N)
    tgt = jnp.repeat(ar, N)

    s = params['embedding'][atoms]
    v = jnp.zeros((N, 3, F), jnp.float32)                # torch layout [N, 3, F]
    for mp, up in zip(params['message'], params['update']):
        d_safe = dist + (1.0 - mask)
        n = jnp.arange(1, R + 1, dtype=jnp.float32)
        rbf = jnp.sin(d_safe * n * math.pi / cutoff) / d_safe
        W = rbf @ mp['wr'] + mp['br'][0]
        fcut = jnp.where(dist < cutoff, 0.5 * (jnp.cos(math.pi * dist / cutoff) + 1.0), 0.0)
        W = W * (fcut * mask)
        h = s @ mp['w1'] + mp['b1'][0]
        phi = (h * jax.nn.sigmoid(h)) @ mp['w2'] + mp['b2'][0]
        split = W * phi[src]
        Wvv, Wvs = split[:, :F], split[:, 2 * F:]
        rhat = r_ij / d_safe
        vsum = v[src] * Wvv[:, None, :] + Wvs[:, None, :] * rhat[:, :, None]
        s = s + jnp.zeros_like(s).at[tgt].add(Wvs)
        v = v + jnp.zeros_like(v).at[tgt].add(vsum)

        Uv = v @ up['uw'] + up['ub'][0]
        Vv = v @ up['vw'] + up['vb'][0]
        Vv_norm = jnp.linalg.norm(Vv, axis=1)
        h = Vv_norm @ up['m1a'] + s @ up['m1b'] + up['mb1'][0]
        out = (h * jax.nn.sigmoid(h)) @ up['m2'] + up['mb2'][0]
        a_vv, a_sv, a_ss = out[:, :F], out[:, F:2 * F], out[:, 2 * F:]
        s = s + a_sv * jnp.sum(Uv * Vv, axis=1) + a_ss
        v = v + a_vv[:, None, :] * Uv
    rp = params['readout']
    h = s @ rp['w1'] + rp['b1'][0]
    return (h * jax.nn.sigmoid(h)) @ rp['w2'] + rp['b2'][0]


# ----------------------------- parameter init -----------------------------

def _linear(key, fan_in, fan_out):
    kw, kb = jax.random.split(key)
    bound = 1.0 / math.sqrt(fan_in)
    w = jax.random.uniform(kw, (fan_in, fan_out), jnp.float32, -bound, bound)
    b = jax.random.uniform(kb, (1, fan_out), jnp.float32, -bound, bound)
    return w, b


def init_params(key, L, F, R, O, num_atoms_types):
    keys = jax.random.split(key, 2 + 2 * L)
    params = {'embedding': jax.random.normal(keys[0], (num_atoms_types, F), jnp.float32)}
    params['message'] = []
    params['update'] = []
    for l in range(L):
        km = jax.random.split(keys[1 + l], 3)
        w1, b1 = _linear(km[0], F, F)
        w2, b2 = _linear(km[1], F, 3 * F)
        wr, br = _linear(km[2], R, 3 * F)
        params['message'].append(dict(w1=w1, b1=b1, w2=w2, b2=b2, wr=wr, br=br))
        ku = jax.random.split(keys[1 + L + l], 4)
        uw, ub = _linear(ku[0], F, F)
        vw, vb = _linear(ku[1], F, F)
        m1, mb1 = _linear(ku[2], 2 * F, F)
        m2, mb2 = _linear(ku[3], F, 3 * F)
        params['update'].append(dict(uw=uw, ub=ub, vw=vw, vb=vb,
                                     m1a=m1[:F], m1b=m1[F:], mb1=mb1,
                                     m2=m2, mb2=mb2))
    kr = jax.random.split(keys[-1], 2)
    w1, b1 = _linear(kr[0], F, F)
    w2, b2 = _linear(kr[1], F, O)
    params['readout'] = dict(w1=w1, b1=b1, w2=w2, b2=b2)
    return params


# ----------------------------- main -----------------------------

if __name__ == "__main__":
    N_ATOMS = 16
    F = 32                 # num_features
    R = 16                 # num_rbf_features
    O = 1                  # num_outputs
    L = 2                  # num_message_passing_layers
    CUTOFF = 5.0
    N_TYPES = 20           # num_unique_atoms (small synthetic vocabulary)
    TB, SB = 8, 8          # target-/source-node block sizes -> grid (2, 2)

    key = jax.random.PRNGKey(0)
    k_param, k_atoms, k_pos = jax.random.split(key, 3)

    params = init_params(k_param, L, F, R, O, N_TYPES)
    atoms = jax.random.randint(k_atoms, (N_ATOMS,), 0, N_TYPES)
    pos = jax.random.uniform(k_pos, (N_ATOMS, 3), jnp.float32, 0.0, 3.0)
    graph_idx = jnp.array([0] * 8 + [1] * 8, jnp.int32)

    out = painn_forward(atoms, pos, graph_idx, params, F, R, O, CUTOFF, TB, SB)
    out = jax.block_until_ready(out)

    ref = jax.block_until_ready(_ref_forward(atoms, pos, graph_idx, params, F, R, O, CUTOFF))
    assert out.shape == (N_ATOMS, O)
    assert jnp.allclose(out, ref, atol=1e-2, rtol=1e-2), (out, ref)

    print("KERNEL_OK")
</pallas_src>

<mosaic_0001>
module attributes {stable_mosaic.version = 11 : i64} {
  func.func @mlp2_kernel(%arg0: i32, %arg1: memref<8x32xf32, #tpu.memory_space<vmem>>, %arg2: memref<32x32xf32, #tpu.memory_space<vmem>>, %arg3: memref<1x32xf32, #tpu.memory_space<vmem>>, %arg4: memref<32x64xf32, #tpu.memory_space<vmem>>, %arg5: memref<1x64xf32, #tpu.memory_space<vmem>>, %arg6: memref<8x64xf32, #tpu.memory_space<vmem>>) attributes {dimension_semantics = [#tpu.dimension_semantics<parallel>], iteration_bounds = array<i64: 2>, scalar_prefetch = 0 : i64, scratch_operands = 0 : i64, tpu.core_type = #tpu.core_type<tc>, window_params = [{transform_indices = @transform_0, window_bounds = array<i64: 8, 32>}, {pipeline_mode = #tpu.pipeline_mode<synchronous>, transform_indices = @transform_1, window_bounds = array<i64: 32, 32>}, {pipeline_mode = #tpu.pipeline_mode<synchronous>, transform_indices = @transform_2, window_bounds = array<i64: 1, 32>}, {pipeline_mode = #tpu.pipeline_mode<synchronous>, transform_indices = @transform_3, window_bounds = array<i64: 32, 64>}, {pipeline_mode = #tpu.pipeline_mode<synchronous>, transform_indices = @transform_4, window_bounds = array<i64: 1, 64>}, {transform_indices = @transform_5, window_bounds = array<i64: 8, 64>}]} {
    %c0 = arith.constant 0 : index
    %c0_0 = arith.constant 0 : index
    %0 = vector.load %arg1[%c0, %c0_0] : memref<8x32xf32, #tpu.memory_space<vmem>>, vector<8x32xf32>
    %c0_1 = arith.constant 0 : index
    %c0_2 = arith.constant 0 : index
    %1 = vector.load %arg2[%c0_1, %c0_2] : memref<32x32xf32, #tpu.memory_space<vmem>>, vector<32x32xf32>
    %cst = arith.constant dense<0.000000e+00> : vector<8x32xf32>
    %2 = tpu.matmul %0, %1, %cst {dimension_numbers = #tpu.dot_dimension_numbers<[1], [0], [0], [1], [0, 0, 1, 1], [], []>} : vector<8x32xf32>, vector<32x32xf32>, vector<8x32xf32> -> vector<8x32xf32>
    %c0_3 = arith.constant 0 : index
    %c0_4 = arith.constant 0 : index
    %3 = vector.load %arg3[%c0_3, %c0_4] : memref<1x32xf32, #tpu.memory_space<vmem>>, vector<1x32xf32>
    %4 = vector.broadcast %3 : vector<1x32xf32> to vector<8x32xf32>
    %5 = arith.addf %2, %4 : vector<8x32xf32>
    %6 = arith.negf %5 : vector<8x32xf32>
    %7 = math.exp %6 : vector<8x32xf32>
    %cst_5 = arith.constant 1.000000e+00 : f32
    %8 = vector.broadcast %cst_5 : f32 to vector<8x32xf32>
    %9 = arith.addf %8, %7 : vector<8x32xf32>
    %10 = arith.divf %8, %9 : vector<8x32xf32>
    %11 = arith.mulf %5, %10 : vector<8x32xf32>
    %c0_6 = arith.constant 0 : index
    %c0_7 = arith.constant 0 : index
    %12 = vector.load %arg4[%c0_6, %c0_7] : memref<32x64xf32, #tpu.memory_space<vmem>>, vector<32x64xf32>
    %cst_8 = arith.constant dense<0.000000e+00> : vector<8x64xf32>
    %13 = tpu.matmul %11, %12, %cst_8 {dimension_numbers = #tpu.dot_dimension_numbers<[1], [0], [0], [1], [0, 0, 1, 1], [], []>} : vector<8x32xf32>, vector<32x64xf32>, vector<8x64xf32> -> vector<8x64xf32>
    %c0_9 = arith.constant 0 : index
    %c0_10 = arith.constant 0 : index
    %14 = vector.load %arg5[%c0_9, %c0_10] : memref<1x64xf32, #tpu.memory_space<vmem>>, vector<1x64xf32>
    %15 = vector.broadcast %14 : vector<1x64xf32> to vector<8x64xf32>
    %16 = arith.addf %13, %15 : vector<8x64xf32>
    %c0_11 = arith.constant 0 : index
    %c0_12 = arith.constant 0 : index
    %17 = vector.load %arg6[%c0_11, %c0_12] : memref<8x64xf32, #tpu.memory_space<vmem>>, vector<8x64xf32>
    tpu.vector_store %arg6[%c0_11, %c0_12], %16 {strides = array<i32>} : memref<8x64xf32, #tpu.memory_space<vmem>>, vector<8x64xf32>,
    return
  }
  func.func @transform_0(%arg0: i32) -> (i32, i32) {
    %c0_i32 = arith.constant 0 : i32
    %c0_i32_0 = arith.constant 0 : i32
    return %arg0, %c0_i32 : i32, i32
  }
  func.func @transform_1(%arg0: i32) -> (i32, i32) {
    %c0_i32 = arith.constant 0 : i32
    %c0_i32_0 = arith.constant 0 : i32
    %c0_i32_1 = arith.constant 0 : i32
    return %c0_i32, %c0_i32_0 : i32, i32
  }
  func.func @transform_2(%arg0: i32) -> (i32, i32) {
    %c0_i32 = arith.constant 0 : i32
    %c0_i32_0 = arith.constant 0 : i32
    %c0_i32_1 = arith.constant 0 : i32
    return %c0_i32, %c0_i32_0 : i32, i32
  }
  func.func @transform_3(%arg0: i32) -> (i32, i32) {
    %c0_i32 = arith.constant 0 : i32
    %c0_i32_0 = arith.constant 0 : i32
    %c0_i32_1 = arith.constant 0 : i32
    return %c0_i32, %c0_i32_0 : i32, i32
  }
  func.func @transform_4(%arg0: i32) -> (i32, i32) {
    %c0_i32 = arith.constant 0 : i32
    %c0_i32_0 = arith.constant 0 : i32
    %c0_i32_1 = arith.constant 0 : i32
    return %c0_i32, %c0_i32_0 : i32, i32
  }
  func.func @transform_5(%arg0: i32) -> (i32, i32) {
    %c0_i32 = arith.constant 0 : i32
    %c0_i32_0 = arith.constant 0 : i32
    return %arg0, %c0_i32 : i32, i32
  }
}

</mosaic_0001>

<llo_original>
// kernel: tpu_custom_call.1
$region0: #{tpu_custom_call.1}
  #allocation0 [shape = 'u32[]', space=smem, size = 0x4, offset = 0x4, fixed_abs, tag = 'smem constant byte address 0x4 - core index']
  #allocation1 [shape = 'u32[144,128]{1,0:T(1,128)}', space=vmem, size = 0x12000, scoped, tag = 'internal scratch']
  %s0 = inlined_call_operand.hbm [shape: f32[16,32], index: 0, kind: input, shape index: {}]
  %s1 = inlined_call_operand.hbm [shape: f32[32,32], index: 1, kind: input, shape index: {}]
  %s2 = inlined_call_operand.vmem [shape: f32[1,32], index: 2, kind: input, shape index: {}]
  %s3 = inlined_call_operand.hbm [shape: f32[32,64], index: 3, kind: input, shape index: {}]
  %s4 = inlined_call_operand.vmem [shape: f32[1,64], index: 4, kind: input, shape index: {}]
  %s5 = inlined_call_operand.hbm [shape: f32[16,64], index: 5, kind: output, shape index: {}]
  %s6 = sld [smem:[#allocation0]]
  $region65: #{tpu_custom_call.1} parent=0
    _
  %s8 = ssub.s32 1, %s6
  %s9 = scalar_select 0, %s8, %s6
  $region1: #{tpu_custom_call.1} parent=0
    #allocation2 [shape = 'u8[8192]{0}', space=vmem, size = 0x2000, scoped, tag = 'input window, operand 0']
    #allocation3 [shape = 's32[2]{0}', space=sflag, size = 0x8, scoped, tag = 'scoped memory for tpu_custom_call.1']
    #allocation4 [shape = 's32[2]{0}', space=sflag, size = 0x8, scoped, tag = 'scoped memory for tpu_custom_call.1']
    #allocation5 [shape = 'u8[16384]{0}', space=vmem, size = 0x4000, scoped, tag = 'input window, operand 1, single buffered']
    #allocation6 [shape = 's32[1]{0}', space=sflag, size = 0x4, scoped, tag = 'scoped memory for tpu_custom_call.1']
    #allocation7 [shape = 'u8[16384]{0}', space=vmem, size = 0x4000, scoped, tag = 'input window, operand 3, single buffered']
    #allocation8 [shape = 'u8[8192]{0}', space=vmem, size = 0x2000, scoped, tag = 'output window, operand 0']
    %10 = vsyncpa [#allocation3], 0
    %s11 = scalar_lea.sflag [#allocation3], 1
    %12 = vsyncpa %s11, 0
    %13 = vsyncpa [#allocation6], 0
    %14 = vsyncpa [#allocation4], 0
    %s15 = scalar_lea.sflag [#allocation4], 1
    %16 = vsyncpa %s15, 0
    loop: start=0, step=1, limit=4
    $region2: #{tpu_custom_call.1} parent=1 // loop_pre_header
      _
    $region3: #{tpu_custom_call.1} parent=1 // loop_header
      %s18 = sphi 0, %s22
      %p19 = scmp.ge.s32.totalorder %s18, 4
      %s28 = sphi 0, %s30
      %s31 = sphi 0, %s28
      %s32 = sphi 0, %s31
      %s48 = sphi 0, %s32
      %s52 = sphi 0, %s52
      %s54 = sphi 0, %s52
      %s55 = sphi 0, %s54
      %s69 = sphi 0, %s55
      %s73 = sphi 0, %s73
      %s75 = sphi 0, %s73
      %s76 = sphi 0, %s75
      %s90 = sphi 0, %s76
      %s94 = sphi 0, %s94
      %s96 = sphi 0, %s94
      %s97 = sphi 0, %s96
      %s111 = sphi 0, %s97
      %s115 = sphi 0, %s115
      %s117 = sphi 0, %s115
      %s118 = sphi 0, %s117
      %s132 = sphi 0, %s118
      %s138 = sphi 0, %s140
      %s141 = sphi 0, %s138
      %s142 = sphi 0, %s141
      %s158 = sphi 0, %s142
    $region4: #{tpu_custom_call.1} parent=1 // loop_header_branch
      %21 = sbr.rel (%p19) target = $region8
    $region5: #{tpu_custom_call.1} parent=1 // loop_body
      %s23 = ssub.s32 %s18, 1
      %s24 = ssub.s32 %s18, 2
      %s25 = sadd.s32 %s18, 1
      %s26 = ssub.s32 %s18, %s25
      %p27 = scmp.eq.s32.totalorder %s26, 0
      %s29 = sadd.s32 %s28, 1
      %s30 = scalar_select %p27, %s28, %s29
      %p33 = pneg %p27
      %p34 = scmp.eq.s32.totalorder %s18, 1
      %p35 = por %p33, %p34
      %p36 = scmp.ne.s32.totalorder %s28, %s31
      %p37 = scmp.eq.s32.totalorder %s18, 0
      %p38 = por %p36, %p37
      %p39 = scmp.ne.s32.totalorder %s28, %s31
      %p40 = scmp.eq.s32.totalorder %s23, 1
      %p41 = por %p39, %p40
      %p42 = scmp.ne.s32.totalorder %s31, %s32
      %p43 = scmp.eq.s32.totalorder %s23, 0
      %p44 = por %p42, %p43
      %p45 = scmp.ne.s32.totalorder %s31, %s32
      %p46 = scmp.eq.s32.totalorder %s24, 1
      %p47 = por %p45, %p46
      %p49 = scmp.ne.s32.totalorder %s32, %s48
      %p50 = scmp.eq.s32.totalorder %s24, 0
      %p51 = por %p49, %p50
      %s53 = sadd.s32 %s52, 1
      %p56 = scmp.eq.s32.totalorder %s18, 1
      %p57 = scmp.ne.s32.totalorder %s52, %s54
      %p58 = scmp.eq.s32.totalorder %s18, 0
      %p59 = por %p57, %p58
      %p60 = scmp.ne.s32.totalorder %s52, %s54
      %p61 = scmp.eq.s32.totalorder %s23, 1
      %p62 = por %p60, %p61
      %p63 = scmp.ne.s32.totalorder %s54, %s55
      %p64 = scmp.eq.s32.totalorder %s23, 0
      %p65 = por %p63, %p64
      %p66 = scmp.ne.s32.totalorder %s54, %s55
      %p67 = scmp.eq.s32.totalorder %s24, 1
      %p68 = por %p66, %p67
      %p70 = scmp.ne.s32.totalorder %s55, %s69
      %p71 = scmp.eq.s32.totalorder %s24, 0
      %p72 = por %p70, %p71
      %s74 = sadd.s32 %s73, 1
      %p77 = scmp.eq.s32.totalorder %s18, 1
      %p78 = scmp.ne.s32.totalorder %s73, %s75
      %p79 = scmp.eq.s32.totalorder %s18, 0
      %p80 = por %p78, %p79
      %p81 = scmp.ne.s32.totalorder %s73, %s75
      %p82 = scmp.eq.s32.totalorder %s23, 1
      %p83 = por %p81, %p82
      %p84 = scmp.ne.s32.totalorder %s75, %s76
      %p85 = scmp.eq.s32.totalorder %s23, 0
      %p86 = por %p84, %p85
      %p87 = scmp.ne.s32.totalorder %s75, %s76
      %p88 = scmp.eq.s32.totalorder %s24, 1
      %p89 = por %p87, %p88
      %p91 = scmp.ne.s32.totalorder %s76, %s90
      %p92 = scmp.eq.s32.totalorder %s24, 0
      %p93 = por %p91, %p92
      %s95 = sadd.s32 %s94, 1
      %p98 = scmp.eq.s32.totalorder %s18, 1
      %p99 = scmp.ne.s32.totalorder %s94, %s96
      %p100 = scmp.eq.s32.totalorder %s18, 0
      %p101 = por %p99, %p100
      %p102 = scmp.ne.s32.totalorder %s94, %s96
      %p103 = scmp.eq.s32.totalorder %s23, 1
      %p104 = por %p102, %p103
      %p105 = scmp.ne.s32.totalorder %s96, %s97
      %p106 = scmp.eq.s32.totalorder %s23, 0
      %p107 = por %p105, %p106
      %p108 = scmp.ne.s32.totalorder %s96, %s97
      %p109 = scmp.eq.s32.totalorder %s24, 1
      %p110 = por %p108, %p109
      %p112 = scmp.ne.s32.totalorder %s97, %s111
      %p113 = scmp.eq.s32.totalorder %s24, 0
      %p114 = por %p112, %p113
      %s116 = sadd.s32 %s115, 1
      %p119 = scmp.eq.s32.totalorder %s18, 1
      %p120 = scmp.ne.s32.totalorder %s115, %s117
      %p121 = scmp.eq.s32.totalorder %s18, 0
      %p122 = por %p120, %p121
      %p123 = scmp.ne.s32.totalorder %s115, %s117
      %p124 = scmp.eq.s32.totalorder %s23, 1
      %p125 = por %p123, %p124
      %p126 = scmp.ne.s32.totalorder %s117, %s118
      %p127 = scmp.eq.s32.totalorder %s23, 0
      %p128 = por %p126, %p127
      %p129 = scmp.ne.s32.totalorder %s117, %s118
      %p130 = scmp.eq.s32.totalorder %s24, 1
      %p131 = por %p129, %p130
      %p133 = scmp.ne.s32.totalorder %s118, %s132
      %p134 = scmp.eq.s32.totalorder %s24, 0
      %p135 = por %p133, %p134
      %s136 = ssub.s32 %s18, %s25
      %p137 = scmp.eq.s32.totalorder %s136, 0
      %s139 = sadd.s32 %s138, 1
      %s140 = scalar_select %p137, %s138, %s139
      %p143 = pneg %p137
      %p144 = scmp.eq.s32.totalorder %s18, 1
      %p145 = por %p143, %p144
      %p146 = scmp.ne.s32.totalorder %s138, %s141
      %p147 = scmp.eq.s32.totalorder %s18, 0
      %p148 = por %p146, %p147
      %p149 = scmp.ne.s32.totalorder %s138, %s141
      %p150 = scmp.eq.s32.totalorder %s23, 1
      %p151 = por %p149, %p150
      %p152 = scmp.ne.s32.totalorder %s141, %s142
      %p153 = scmp.eq.s32.totalorder %s23, 0
      %p154 = por %p152, %p153
      %p155 = scmp.ne.s32.totalorder %s141, %s142
      %p156 = scmp.eq.s32.totalorder %s24, 1
      %p157 = por %p155, %p156
      %p159 = scmp.ne.s32.totalorder %s142, %s158
      %p160 = scmp.eq.s32.totalorder %s24, 0
      %p161 = por %p159, %p160
      %p162 = scmp.le.s32.totalorder 1, %s18
      %p163 = scmp.lt.s32.totalorder %s18, 3
      %p164 = pnand %p162, %p163
      %p165 = pneg %p164
      // Predicated region
      $region9: #{tpu_custom_call.1} parent=5 // pred_check
        _
      $region10: #{tpu_custom_call.1} parent=5 // pred_check_branch
        %167 = sbr.rel (%p164) target = $region12
      $region11: #{tpu_custom_call.1} parent=5 // pred_region
        %s168 = ssub.s32 %s18, 1
        // Predicated region
        $region13: #{tpu_custom_call.1} parent=11 // pred_check
          %p169 = pneg %p65
        $region14: #{tpu_custom_call.1} parent=11 // pred_check_branch
          %171 = sbr.rel (%p169) target = $region16
        $region15: #{tpu_custom_call.1} parent=11 // pred_region
          %s173 = ssub.s32 512, 512
          %174 = vsyncadd [#allocation6], %s173
          %s175 = sshll.u32 [#allocation5], 4
          %s176 = int_to_ptr.vmem [resolvable:$true] %s175
          %181 = dma.hbm_to_vmem [thread:$0]  %s1, 512, %s176, [#allocation6], 128, 128, 8
        $region16: #{tpu_custom_call.1} parent=11 // pred_fallthru
          _
        // Predicated region
        $region17: #{tpu_custom_call.1} parent=11 // pred_check
          %p182 = pneg %p86
        $region18: #{tpu_custom_call.1} parent=11 // pred_check_branch
          %184 = sbr.rel (%p182) target = $region20
        $region19: #{tpu_custom_call.1} parent=11 // pred_region
          _
        $region20: #{tpu_custom_call.1} parent=11 // pred_fallthru
          _
        // Predicated region
        $region21: #{tpu_custom_call.1} parent=11 // pred_check
          %p185 = pneg %p107
        $region22: #{tpu_custom_call.1} parent=11 // pred_check_branch
          %187 = sbr.rel (%p185) target = $region24
        $region23: #{tpu_custom_call.1} parent=11 // pred_region
          %s189 = ssub.s32 512, 512
          %190 = vsyncadd [#allocation6], %s189
          %s191 = sshll.u32 [#allocation7], 4
          %s192 = int_to_ptr.vmem [resolvable:$true] %s191
          %197 = dma.hbm_to_vmem [thread:$0]  %s3, 512, %s192, [#allocation6], 128, 128, 8
        $region24: #{tpu_custom_call.1} parent=11 // pred_fallthru
          _
        // Predicated region
        $region25: #{tpu_custom_call.1} parent=11 // pred_check
          %p198 = pneg %p128
        $region26: #{tpu_custom_call.1} parent=11 // pred_check_branch
          %200 = sbr.rel (%p198) target = $region28
        $region27: #{tpu_custom_call.1} parent=11 // pred_region
          _
        $region28: #{tpu_custom_call.1} parent=11 // pred_fallthru
          _
      $region12: #{tpu_custom_call.1} parent=5 // pred_fallthru
        _
      %p201 = scmp.lt.s32.totalorder %s18, 2
      // Predicated region
      $region29: #{tpu_custom_call.1} parent=5 // pred_check
        %p202 = pneg %p201
      $region30: #{tpu_custom_call.1} parent=5 // pred_check_branch
        %204 = sbr.rel (%p202) target = $region32
      $region31: #{tpu_custom_call.1} parent=5 // pred_region
        // Predicated region
        $region33: #{tpu_custom_call.1} parent=31 // pred_check
          %p205 = pneg %p38
        $region34: #{tpu_custom_call.1} parent=31 // pred_check_branch
          %207 = sbr.rel (%p205) target = $region36
        $region35: #{tpu_custom_call.1} parent=31 // pred_region
          %s208 = sand.u32 %s28, 1
          %s209 = scalar_lea.sflag [#allocation3], %s208
          %s210 = sand.u32 %s28, 1
          %s211 = smul.addr %s210, 8
          %s212 = scalar_lea.vmem [#allocation2], %s211
          %s214 = ssub.s32 128, 128
          %215 = vsyncadd %s209, %s214
          %s216 = smul.addr %s18, 128
          %s217 = scalar_lea.hbm %s0, %s216
          %s219 = sshll.u32 %s212, 4
          %s220 = int_to_ptr.vmem [resolvable:$true] %s219
          %222 = dma.hbm_to_vmem [thread:$0]  %s217, 128, %s220, %s209
        $region36: #{tpu_custom_call.1} parent=31 // pred_fallthru
          _
      $region32: #{tpu_custom_call.1} parent=5 // pred_fallthru
        _
      %p223 = scmp.le.s32.totalorder 1, %s18
      %p224 = scmp.lt.s32.totalorder %s18, 3
      %p225 = pnand %p223, %p224
      %p226 = pneg %p225
      // Predicated region
      $region37: #{tpu_custom_call.1} parent=5 // pred_check
        _
      $region38: #{tpu_custom_call.1} parent=5 // pred_check_branch
        %228 = sbr.rel (%p225) target = $region40
      $region39: #{tpu_custom_call.1} parent=5 // pred_region
        %s229 = ssub.s32 %s18, 1
        %s230 = sand.u32 %s31, 1
        %s231 = scalar_lea.sflag [#allocation3], %s230
        %s232 = sand.u32 %s31, 1
        %s233 = smul.addr %s232, 8
        %s234 = scalar_lea.vmem [#allocation2], %s233
        // Predicated region
        $region41: #{tpu_custom_call.1} parent=39 // pred_check
          %p235 = pneg %p44
        $region42: #{tpu_custom_call.1} parent=39 // pred_check_branch
          %237 = sbr.rel (%p235) target = $region44
        $region43: #{tpu_custom_call.1} parent=39 // pred_region
          %238 = dma.done %s231, 128
        $region44: #{tpu_custom_call.1} parent=39 // pred_fallthru
          _
        // Predicated region
        $region45: #{tpu_custom_call.1} parent=39 // pred_check
          %p239 = pneg %p65
        $region46: #{tpu_custom_call.1} parent=39 // pred_check_branch
          %241 = sbr.rel (%p239) target = $region48
        $region47: #{tpu_custom_call.1} parent=39 // pred_region
          %242 = dma.done [#allocation6], 512
        $region48: #{tpu_custom_call.1} parent=39 // pred_fallthru
          _
        // Predicated region
        $region49: #{tpu_custom_call.1} parent=39 // pred_check
          %p243 = pneg %p107
        $region50: #{tpu_custom_call.1} parent=39 // pred_check_branch
          %245 = sbr.rel (%p243) target = $region52
        $region51: #{tpu_custom_call.1} parent=39 // pred_region
          %246 = dma.done [#allocation6], 512
        $region52: #{tpu_custom_call.1} parent=39 // pred_fallthru
          _
        %s247 = sand.u32 %s31, 1
        %s248 = scalar_lea.sflag [#allocation3], %s247
        %s249 = sand.u32 %s31, 1
        %s250 = smul.addr %s249, 8
        %s251 = scalar_lea.vmem [#allocation2], %s250
        %p252 = pneg %p44
        %p253 = pneg %p41
        %p254 = pneg %p65
        %p255 = pneg %p62
        %p256 = pneg %p86
        %p257 = pneg %p83
        %p258 = pneg %p107
        %p259 = pneg %p104
        %p260 = pneg %p128
        %p261 = pneg %p125
        %p262 = pneg %p154
        %p263 = pneg %p151
        %s264 = sand.u32 %s141, 1
        %s265 = scalar_lea.sflag [#allocation4], %s264
        %s266 = sand.u32 %s141, 1
        %s267 = smul.addr %s266, 8
        %s268 = scalar_lea.vmem [#allocation8], %s267
        %v269 = vld [vmem:[%s234] sm:$0xff]
        %v270 = vld [vmem:[#allocation5] sm:$0xff]
        %v271 = vld [vmem:[#allocation5 + $0x8] sm:$0xff]
        %v272 = vld [vmem:[#allocation5 + $0x10] sm:$0xff]
        %v273 = vld [vmem:[#allocation5 + $0x18] sm:$0xff]
        %v274 = vld [vmem:[%s2] sm:$0x1]
        %v276 = vlaneseq
        %v277 = vshrl.u32 %v276, 7
        %v278 = vsub.s32 0, %v277
        %v279 = vrot.slane %v274, %v278
        %vm281 = vcmask 261120
        %v283 = vsel %vm281, %v269, 0
        %285 = vmatprep.subr.mxu0 0.0
        %286 = vmatpush1.msra.mxu0 %v270
        %287 = vmatprep.subr.mxu0 0.0
        %288 = vmatpush1.msra.mxu0 %v271
        %289 = vmatprep.subr.mxu0 0.0
        %290 = vmatpush1.msra.mxu0 %v272
        %291 = vmatprep.subr.mxu0 0.0
        %292 = vmatpush1.msra.mxu0 %v273
        %293 = vmatprep.subr.mxu0 0.0
        %294 = vmatpush1.msra.mxu0 0.0
        %295 = vmatprep.subr.mxu0 0.0
        %296 = vmatpush1.msra.mxu0 0.0
        %297 = vmatprep.subr.mxu0 0.0
        %298 = vmatpush1.msra.mxu0 0.0
        %299 = vmatprep.subr.mxu0 0.0
        %300 = vmatpush1.msra.mxu0 0.0
        %301 = vmatprep.subr.mxu0 0.0
        %302 = vmatpush1.msra.mxu0 0.0
        %303 = vmatprep.subr.mxu0 0.0
        %304 = vmatpush1.msra.mxu0 0.0
        %305 = vmatprep.subr.mxu0 0.0
        %306 = vmatpush1.msra.mxu0 0.0
        %307 = vmatprep.subr.mxu0 0.0
        %308 = vmatpush1.msra.mxu0 0.0
        %309 = vmatprep.subr.mxu0 0.0
        %310 = vmatpush1.msra.mxu0 0.0
        %311 = vmatprep.subr.mxu0 0.0
        %312 = vmatpush1.msra.mxu0 0.0
        %313 = vmatprep.subr.mxu0 0.0
        %314 = vmatpush1.msra.mxu0 0.0
        %315 = vmatprep.subr.mxu0 0.0
        %316 = vmatpush1.msra.mxu0 0.0
        %317 = vmatprep.subr.mxu0 0.0
        %318 = vmatpush1.msra.mxu0 0.0
        %319 = vmatprep.subr.mxu0 0.0
        %320 = vmatpush1.msra.mxu0 0.0
        %321 = vmatprep.subr.mxu0 0.0
        %322 = vmatpush1.msra.mxu0 0.0
        %323 = vmatprep.subr.mxu0 0.0
        %324 = vmatpush1.msra.mxu0 0.0
        %325 = vmatprep.subr.mxu0 0.0
        %326 = vmatpush1.msra.mxu0 0.0
        %327 = vmatprep.subr.mxu0 0.0
        %328 = vmatpush1.msra.mxu0 0.0
        %329 = vmatprep.subr.mxu0 0.0
        %330 = vmatpush1.msra.mxu0 0.0
        %331 = vmatprep.subr.mxu0 0.0
        %332 = vmatpush1.msra.mxu0 0.0
        %333 = vmatprep.subr.mxu0 0.0
        %334 = vmatpush1.msra.mxu0 0.0
        %335 = vmatprep.subr.mxu0 0.0
        %336 = vmatpush1.msra.mxu0 0.0
        %337 = vmatprep.subr.mxu0 0.0
        %338 = vmatpush1.msra.mxu0 0.0
        %339 = vmatprep.subr.mxu0 0.0
        %340 = vmatpush1.msra.mxu0 0.0
        %341 = vmatprep.subr.mxu0 0.0
        %342 = vmatpush1.msra.mxu0 0.0
        %343 = vmatprep.subr.mxu0 0.0
        %344 = vmatpush1.msra.mxu0 0.0
        %345 = vmatprep.subr.mxu0 0.0
        %346 = vmatpush1.msra.mxu0 0.0
        %347 = vmatprep.subr.mxu0 0.0
        %348 = vmatpush1.msra.mxu0 0.0
        %349 = vmatprep.mubr.f32.mxu0 0.0
        %350 = vmatmul.mubr.f32.gmra.mrb[0].mxu0 %v283
        %v351 = vpop.f32.mrb[0].mxu0
        %v352 = vadd.f32 %v279, %v351
        %v353 = vpop.f32.mrb[0].mxu0
        %354 = vdwg.mxu0
        %v355 = vxor.u32 %v352, 2147483648
        %v356 = vmul.f32 %v355, 1.442695
        %v357 = vpow.pop %v356
        %v358 = vadd.f32 %v357, 1.0
        %v359 = vrcp.pop %v358
        %v360 = vmul.f32 1.0, %v359
        %v361 = vmul.f32 %v352, %v360
        %v362 = vld [vmem:[#allocation7] sm:$0xff]
        %v363 = vld [vmem:[#allocation7 + $0x8] sm:$0xff]
        %v364 = vld [vmem:[#allocation7 + $0x10] sm:$0xff]
        %v365 = vld [vmem:[#allocation7 + $0x18] sm:$0xff]
        %v366 = vld [vmem:[%s4] sm:$0x1]
        %v368 = vlaneseq
        %v369 = vshrl.u32 %v368, 7
        %v370 = vsub.s32 0, %v369
        %v371 = vrot.slane %v366, %v370
        %v374 = vsel %vm281, %v361, 0
        %376 = vmatprep.subr.mxu0 0.0
        %377 = vmatpush1.msra.mxu0 %v362
        %378 = vmatprep.subr.mxu0 0.0
        %379 = vmatpush1.msra.mxu0 %v363
        %380 = vmatprep.subr.mxu0 0.0
        %381 = vmatpush1.msra.mxu0 %v364
        %382 = vmatprep.subr.mxu0 0.0
        %383 = vmatpush1.msra.mxu0 %v365
        %384 = vmatprep.subr.mxu0 0.0
        %385 = vmatpush1.msra.mxu0 0.0
        %386 = vmatprep.subr.mxu0 0.0
        %387 = vmatpush1.msra.mxu0 0.0
        %388 = vmatprep.subr.mxu0 0.0
        %389 = vmatpush1.msra.mxu0 0.0
        %390 = vmatprep.subr.mxu0 0.0
        %391 = vmatpush1.msra.mxu0 0.0
        %392 = vmatprep.subr.mxu0 0.0
        %393 = vmatpush1.msra.mxu0 0.0
        %394 = vmatprep.subr.mxu0 0.0
        %395 = vmatpush1.msra.mxu0 0.0
        %396 = vmatprep.subr.mxu0 0.0
        %397 = vmatpush1.msra.mxu0 0.0
        %398 = vmatprep.subr.mxu0 0.0
        %399 = vmatpush1.msra.mxu0 0.0
        %400 = vmatprep.subr.mxu0 0.0
        %401 = vmatpush1.msra.mxu0 0.0
        %402 = vmatprep.subr.mxu0 0.0
        %403 = vmatpush1.msra.mxu0 0.0
        %404 = vmatprep.subr.mxu0 0.0
        %405 = vmatpush1.msra.mxu0 0.0
        %406 = vmatprep.subr.mxu0 0.0
        %407 = vmatpush1.msra.mxu0 0.0
        %408 = vmatprep.subr.mxu0 0.0
        %409 = vmatpush1.msra.mxu0 0.0
        %410 = vmatprep.subr.mxu0 0.0
        %411 = vmatpush1.msra.mxu0 0.0
        %412 = vmatprep.subr.mxu0 0.0
        %413 = vmatpush1.msra.mxu0 0.0
        %414 = vmatprep.subr.mxu0 0.0
        %415 = vmatpush1.msra.mxu0 0.0
        %416 = vmatprep.subr.mxu0 0.0
        %417 = vmatpush1.msra.mxu0 0.0
        %418 = vmatprep.subr.mxu0 0.0
        %419 = vmatpush1.msra.mxu0 0.0
        %420 = vmatprep.subr.mxu0 0.0
        %421 = vmatpush1.msra.mxu0 0.0
        %422 = vmatprep.subr.mxu0 0.0
        %423 = vmatpush1.msra.mxu0 0.0
        %424 = vmatprep.subr.mxu0 0.0
        %425 = vmatpush1.msra.mxu0 0.0
        %426 = vmatprep.subr.mxu0 0.0
        %427 = vmatpush1.msra.mxu0 0.0
        %428 = vmatprep.subr.mxu0 0.0
        %429 = vmatpush1.msra.mxu0 0.0
        %430 = vmatprep.subr.mxu0 0.0
        %431 = vmatpush1.msra.mxu0 0.0
        %432 = vmatprep.subr.mxu0 0.0
        %433 = vmatpush1.msra.mxu0 0.0
        %434 = vmatprep.subr.mxu0 0.0
        %435 = vmatpush1.msra.mxu0 0.0
        %436 = vmatprep.subr.mxu0 0.0
        %437 = vmatpush1.msra.mxu0 0.0
        %438 = vmatprep.subr.mxu0 0.0
        %439 = vmatpush1.msra.mxu0 0.0
        %440 = vmatprep.mubr.f32.mxu0 0.0
        %441 = vmatmul.mubr.f32.gmra.mrb[0].mxu0 %v374
        %v442 = vpop.f32.mrb[0].mxu0
        %v443 = vadd.f32 %v371, %v442
        %v444 = vpop.f32.mrb[0].mxu0
        %445 = vdwg.mxu0
        %vm446 = vcmask 523264
        %447 = vst.msk [vmem:[%s268] sm:$0xff] %vm446, %v443
        %s448 = sand.u32 %s141, 1
        %s449 = scalar_lea.sflag [#allocation4], %s448
        %s450 = sand.u32 %s141, 1
        %s451 = smul.addr %s450, 8
        %s452 = scalar_lea.vmem [#allocation8], %s451
        // Predicated region
        $region53: #{tpu_custom_call.1} parent=39 // pred_check
          %p453 = pneg %p151
        $region54: #{tpu_custom_call.1} parent=39 // pred_check_branch
          %455 = sbr.rel (%p453) target = $region56
        $region55: #{tpu_custom_call.1} parent=39 // pred_region
          %s457 = ssub.s32 128, 128
          %458 = vsyncadd %s449, %s457
          %s459 = smul.addr %s23, 128
          %s460 = scalar_lea.hbm %s5, %s459
          %s462 = sshll.u32 %s452, 4
          %s463 = int_to_ptr.vmem [resolvable:$true] %s462
          %465 = dma.vmem_to_hbm [thread:$0]  %s463, 128, %s460, %s449
        $region56: #{tpu_custom_call.1} parent=39 // pred_fallthru
          _
      $region40: #{tpu_custom_call.1} parent=5 // pred_fallthru
        _
      %p466 = scmp.le.s32.totalorder 2, %s18
      // Predicated region
      $region57: #{tpu_custom_call.1} parent=5 // pred_check
        %p467 = pneg %p466
      $region58: #{tpu_custom_call.1} parent=5 // pred_check_branch
        %469 = sbr.rel (%p467) target = $region60
      $region59: #{tpu_custom_call.1} parent=5 // pred_region
        %s470 = ssub.s32 %s18, 2
        // Predicated region
        $region61: #{tpu_custom_call.1} parent=59 // pred_check
          %p471 = pneg %p157
        $region62: #{tpu_custom_call.1} parent=59 // pred_check_branch
          %473 = sbr.rel (%p471) target = $region64
        $region63: #{tpu_custom_call.1} parent=59 // pred_region
          %s474 = sand.u32 %s142, 1
          %s475 = scalar_lea.sflag [#allocation4], %s474
          %s476 = sand.u32 %s142, 1
          %s477 = smul.addr %s476, 8
          %s478 = scalar_lea.vmem [#allocation8], %s477
          %479 = dma.done %s475, 128
        $region64: #{tpu_custom_call.1} parent=59 // pred_fallthru
          _
      $region60: #{tpu_custom_call.1} parent=5 // pred_fallthru
        _
    $region6: #{tpu_custom_call.1} parent=1 // loop_footer
      %s22 = sadd.s32 1, %s18
    $region7: #{tpu_custom_call.1} parent=1 // loop_footer_branch
      %17 = sbr.rel target = $region3
    $region8: #{tpu_custom_call.1} parent=1 // loop_exit
      _
    %480 = vsyncpa [#allocation3], 1
    %s481 = scalar_lea.sflag [#allocation3], 1
    %482 = vsyncpa %s481, 1
    %483 = vsyncpa [#allocation6], 1
    %484 = vsyncpa [#allocation4], 1
    %s485 = scalar_lea.sflag [#allocation4], 1
    %486 = vsyncpa %s485, 1

</llo_original>
